<compile_context>
chip_gen: v6e
topology: v6e:2x2x1
jax: 0.10.0
libtpu: 0.0.40
codegen_flags: <defaults>
</compile_context>

<pallas_src>
import math

import jax
import jax.numpy as jnp
from jax import lax
from jax.experimental import pallas as pl
from jax.experimental.pallas import tpu as pltpu


def _round_up(a: int, b: int) -> int:
    return (a + b - 1) // b * b


def _linear_kernel_acc_in_out(x_ref, w_ref, b_ref, o_ref):
    # f32 output: o_ref is resident across the K grid axis -> accumulate in place
    # (no separate VMEM scratch, no epilogue read+add).
    k = pl.program_id(2)

    @pl.when(k == 0)
    def _():
        # Fold the bias into the accumulator init.
        o_ref[...] = jnp.broadcast_to(b_ref[...], o_ref.shape)

    o_ref[...] += jnp.dot(x_ref[...], w_ref[...],
                          preferred_element_type=jnp.float32)


def _linear_kernel_scratch(x_ref, w_ref, b_ref, o_ref, acc_ref):
    # Generic path (non-f32 output dtype): f32 VMEM accumulator scratch.
    k = pl.program_id(2)

    @pl.when(k == 0)
    def _():
        acc_ref[...] = jnp.broadcast_to(b_ref[...].astype(jnp.float32),
                                        acc_ref.shape)

    acc_ref[...] += jnp.dot(x_ref[...], w_ref[...],
                            preferred_element_type=jnp.float32)

    @pl.when(k == pl.num_programs(2) - 1)
    def _():
        o_ref[...] = acc_ref[...].astype(o_ref.dtype)


def orthogonal_linear(x, weight_t, bias, *, tm=1024, tn=512, tk=512,
                      use_bf16=False):
    """y = x @ weight_t + bias  ==  x @ W.T + b  with W in PyTorch (out,in) layout.

    x:        (..., K)  activations (last axis = in_features, like nn.Linear)
    weight_t: (K, N)    pre-transposed weight (transpose once at init, not per call)
    bias:     (N,)
    """
    orig_shape = x.shape
    K = orig_shape[-1]
    x2d = x.reshape(-1, K)
    M = x2d.shape[0]
    Kw, N = weight_t.shape
    assert Kw == K, "in_features mismatch between x and weight"
    out_dtype = x.dtype

    # Tile clamping.  Blocks equal to the full dim (or 8/128 multiples) satisfy
    # Mosaic's layout rules; partial boundary blocks along M/N are masked by
    # Pallas on the output write, so no host-side padding is needed there.
    tm = M if M <= tm else tm
    tn = N if N <= tn else tn
    if K <= tk:
        tk, K_pad = K, K
    else:
        K_pad = _round_up(K, tk)

    xp, wp = x2d, weight_t
    if K_pad != K:
        # Only K must stay zero-padded (zeros contribute nothing to the dot).
        # TODO(synk): in a real model, hoist this weight K-pad to parameter init.
        xp = jnp.pad(x2d, ((0, 0), (0, K_pad - K)))
        wp = jnp.pad(weight_t, ((0, K_pad - K), (0, 0)))

    if use_bf16:
        # bf16 operands (half the HBM/DMA bytes, bf16-native MXU rate),
        # f32 accumulation.  Numerics deviate slightly from the f32 reference.
        xp = xp.astype(jnp.bfloat16)
        wp = wp.astype(jnp.bfloat16)
    bp = bias.astype(jnp.float32).reshape(1, N)

    grid = (pl.cdiv(M, tm), pl.cdiv(N, tn), K_pad // tk)

    in_specs = [
        pl.BlockSpec((tm, tk), lambda i, j, k: (i, k)),   # x tile
        pl.BlockSpec((tk, tn), lambda i, j, k: (k, j)),   # weight tile (K, N)
        pl.BlockSpec((1, tn), lambda i, j, k: (0, j)),    # bias tile
    ]
    out_spec = pl.BlockSpec((tm, tn), lambda i, j, k: (i, j))

    if out_dtype == jnp.float32:
        kernel, scratch = _linear_kernel_acc_in_out, []
    else:
        kernel, scratch = _linear_kernel_scratch, [pltpu.VMEM((tm, tn), jnp.float32)]

    out = pl.pallas_call(
        kernel,
        out_shape=jax.ShapeDtypeStruct((M, N), out_dtype),
        grid_spec=pltpu.PrefetchScalarGridSpec(
            num_scalar_prefetch=0,
            grid=grid,
            in_specs=in_specs,
            out_specs=out_spec,
            scratch_shapes=scratch,
        ),
        compiler_params=pltpu.CompilerParams(
            # M/N axes shard across v7x's two TensorCores when the grid has
            # >= 2 (i, j) programs; the reduction axis stays sequential.
            dimension_semantics=("parallel", "parallel", "arbitrary"),
        ),
    )(xp, wp, bp)

    return out.reshape(*orig_shape[:-1], N)


def init_orthogonal_linear_params(key, in_features, out_features):
    """Mirror OrthogonalLinear's init.

    Returns (weight, weight_t, bias):
      weight:   (out_features, in_features)  PyTorch layout (reference only)
      weight_t: (in_features, out_features)  transposed ONCE here for the kernel
      bias:     (out_features,)              U(-1/sqrt(in), 1/sqrt(in)) like nn.Linear
    """
    kw, kb = jax.random.split(key)
    weight = jax.nn.initializers.orthogonal()(
        kw, (out_features, in_features), jnp.float32
    )
    bound = 1.0 / math.sqrt(in_features)
    bias = jax.random.uniform(
        kb, (out_features,), jnp.float32, minval=-bound, maxval=bound
    )
    return weight, weight.T, bias


if __name__ == "__main__":
    key = jax.random.PRNGKey(0)
    k_x, k_p, k_x2, k_w2, k_b2 = jax.random.split(key, 5)

    # --- Test 1: module-sized demo (batch=2, seq=8, in=32, out=16) ---
    batch, seq, in_features, out_features = 2, 8, 32, 16
    x = jax.random.normal(k_x, (batch, seq, in_features), jnp.float32)
    weight, weight_t, bias = init_orthogonal_linear_params(
        k_p, in_features, out_features
    )

    y = orthogonal_linear(x, weight_t, bias)
    jax.block_until_ready(y)
    assert y.shape == (batch, seq, out_features)

    y_ref = jnp.dot(x.reshape(-1, in_features), weight.T,
                    precision=lax.Precision.HIGHEST) + bias
    y_ref = y_ref.reshape(batch, seq, out_features)
    assert jnp.allclose(y, y_ref, atol=1e-4, rtol=1e-4)

    # Gated bf16-operand / f32-accumulate path (looser tolerance).
    y_bf16 = orthogonal_linear(x, weight_t, bias, use_bf16=True)
    jax.block_until_ready(y_bf16)
    assert jnp.allclose(y_bf16, y_ref, atol=5e-2, rtol=5e-2)

    # --- Test 2: boundary blocks (M, N not tile multiples), multi-K-step, K pad ---
    M2, K2, N2 = 200, 160, 300
    x2 = jax.random.normal(k_x2, (M2, K2), jnp.float32)
    w2 = 0.05 * jax.random.normal(k_w2, (N2, K2), jnp.float32)
    b2 = jax.random.normal(k_b2, (N2,), jnp.float32)
    y2 = orthogonal_linear(x2, w2.T, b2, tm=64, tn=128, tk=128)
    jax.block_until_ready(y2)
    y2_ref = jnp.dot(x2, w2.T, precision=lax.Precision.HIGHEST) + b2
    assert jnp.allclose(y2, y2_ref, atol=2e-3, rtol=2e-3)

    print("KERNEL_OK")
</pallas_src>

<mosaic_0001>
module attributes {stable_mosaic.version = 11 : i64} {
  func.func @_linear_kernel_acc_in_out(%arg0: i32, %arg1: i32, %arg2: i32, %arg3: memref<16x32xf32, #tpu.memory_space<vmem>>, %arg4: memref<32x16xf32, #tpu.memory_space<vmem>>, %arg5: memref<1x16xf32, #tpu.memory_space<vmem>>, %arg6: memref<16x16xf32, #tpu.memory_space<vmem>>) attributes {dimension_semantics = [#tpu.dimension_semantics<parallel>, #tpu.dimension_semantics<parallel>, #tpu.dimension_semantics<arbitrary>], iteration_bounds = array<i64: 1, 1, 1>, scalar_prefetch = 0 : i64, scratch_operands = 0 : i64, tpu.core_type = #tpu.core_type<tc>, window_params = [{transform_indices = @transform_0, window_bounds = array<i64: 16, 32>}, {transform_indices = @transform_1, window_bounds = array<i64: 32, 16>}, {transform_indices = @transform_2, window_bounds = array<i64: 1, 16>}, {transform_indices = @transform_3, window_bounds = array<i64: 16, 16>}]} {
    %c0_i32 = arith.constant 0 : i32
    %0 = arith.cmpi eq, %arg2, %c0_i32 : i32
    %1 = arith.extui %0 : i1 to i32
    %c0_i32_0 = arith.constant 0 : i32
    %2 = arith.cmpi ne, %1, %c0_i32_0 : i32
    scf.if %2 {
      %c0_8 = arith.constant 0 : index
      %c0_9 = arith.constant 0 : index
      %9 = vector.load %arg5[%c0_8, %c0_9] : memref<1x16xf32, #tpu.memory_space<vmem>>, vector<1x16xf32>
      %10 = vector.shape_cast %9 : vector<1x16xf32> to vector<1x16xf32>
      %11 = vector.broadcast %10 : vector<1x16xf32> to vector<16x16xf32>
      %c0_10 = arith.constant 0 : index
      %c0_11 = arith.constant 0 : index
      %12 = vector.load %arg6[%c0_10, %c0_11] : memref<16x16xf32, #tpu.memory_space<vmem>>, vector<16x16xf32>
      tpu.vector_store %arg6[%c0_10, %c0_11], %11 {strides = array<i32>} : memref<16x16xf32, #tpu.memory_space<vmem>>, vector<16x16xf32>,
    } else {
    }
    %c0 = arith.constant 0 : index
    %c0_1 = arith.constant 0 : index
    %3 = vector.load %arg6[%c0, %c0_1] : memref<16x16xf32, #tpu.memory_space<vmem>>, vector<16x16xf32>
    %c0_2 = arith.constant 0 : index
    %c0_3 = arith.constant 0 : index
    %4 = vector.load %arg3[%c0_2, %c0_3] : memref<16x32xf32, #tpu.memory_space<vmem>>, vector<16x32xf32>
    %c0_4 = arith.constant 0 : index
    %c0_5 = arith.constant 0 : index
    %5 = vector.load %arg4[%c0_4, %c0_5] : memref<32x16xf32, #tpu.memory_space<vmem>>, vector<32x16xf32>
    %cst = arith.constant dense<0.000000e+00> : vector<16x16xf32>
    %6 = tpu.matmul %4, %5, %cst {dimension_numbers = #tpu.dot_dimension_numbers<[1], [0], [0], [1], [0, 0, 1, 1], [], []>} : vector<16x32xf32>, vector<32x16xf32>, vector<16x16xf32> -> vector<16x16xf32>
    %7 = arith.addf %3, %6 : vector<16x16xf32>
    %c0_6 = arith.constant 0 : index
    %c0_7 = arith.constant 0 : index
    %8 = vector.load %arg6[%c0_6, %c0_7] : memref<16x16xf32, #tpu.memory_space<vmem>>, vector<16x16xf32>
    tpu.vector_store %arg6[%c0_6, %c0_7], %7 {strides = array<i32>} : memref<16x16xf32, #tpu.memory_space<vmem>>, vector<16x16xf32>,
    return
  }
  func.func @transform_0(%arg0: i32, %arg1: i32, %arg2: i32) -> (i32, i32) {
    %c0_i32 = arith.constant 0 : i32
    return %arg0, %arg2 : i32, i32
  }
  func.func @transform_1(%arg0: i32, %arg1: i32, %arg2: i32) -> (i32, i32) {
    %c0_i32 = arith.constant 0 : i32
    return %arg2, %arg1 : i32, i32
  }
  func.func @transform_2(%arg0: i32, %arg1: i32, %arg2: i32) -> (i32, i32) {
    %c0_i32 = arith.constant 0 : i32
    %c0_i32_0 = arith.constant 0 : i32
    return %c0_i32, %arg1 : i32, i32
  }
  func.func @transform_3(%arg0: i32, %arg1: i32, %arg2: i32) -> (i32, i32) {
    %c0_i32 = arith.constant 0 : i32
    return %arg0, %arg1 : i32, i32
  }
}

</mosaic_0001>

<llo_original>
// kernel: tpu_custom_call.1
$region0: #{tpu_custom_call.1}
  #allocation0 [shape = 'u32[]', space=smem, size = 0x4, offset = 0x4, fixed_abs, tag = 'smem constant byte address 0x4 - core index']
  #allocation1 [shape = 'u32[144,128]{1,0:T(1,128)}', space=vmem, size = 0x12000, scoped, tag = 'internal scratch']
  %s0 = inlined_call_operand.vmem [shape: f32[16,32], index: 0, kind: input, shape index: {}]
  %s1 = inlined_call_operand.vmem [shape: f32[32,16], index: 1, kind: input, shape index: {}]
  %s2 = inlined_call_operand.vmem [shape: f32[1,16], index: 2, kind: input, shape index: {}]
  %s3 = inlined_call_operand.hbm [shape: f32[16,16], index: 3, kind: output, shape index: {}]
  %s4 = sld [smem:[#allocation0]]
  $region26: #{tpu_custom_call.1} parent=0
    _
  %s6 = ssub.s32 1, %s4
  %s7 = scalar_select 0, %s6, %s4
  $region1: #{tpu_custom_call.1} parent=0
    #allocation2 [shape = 'u8[8192]{0}', space=vmem, size = 0x2000, scoped, tag = 'output window, operand 0, single buffered']
    #allocation3 [shape = 's32[1]{0}', space=sflag, size = 0x4, scoped, tag = 'scoped memory for tpu_custom_call.1']
    %8 = vsyncpa [#allocation3], 0
    // Predicated region
    $region2: #{tpu_custom_call.1} parent=1 // pred_check
      _
    $region3: #{tpu_custom_call.1} parent=1 // pred_check_branch
      %10 = sbr.rel (0) target = $region5
    $region4: #{tpu_custom_call.1} parent=1 // pred_region
      _
    $region5: #{tpu_custom_call.1} parent=1 // pred_fallthru
      _
    // Predicated region
    $region6: #{tpu_custom_call.1} parent=1 // pred_check
      _
    $region7: #{tpu_custom_call.1} parent=1 // pred_check_branch
      %12 = sbr.rel (0) target = $region9
    $region8: #{tpu_custom_call.1} parent=1 // pred_region
      _
    $region9: #{tpu_custom_call.1} parent=1 // pred_fallthru
      _
    // Predicated region
    $region10: #{tpu_custom_call.1} parent=1 // pred_check
      _
    $region11: #{tpu_custom_call.1} parent=1 // pred_check_branch
      %14 = sbr.rel (0) target = $region13
    $region12: #{tpu_custom_call.1} parent=1 // pred_region
      _
    $region13: #{tpu_custom_call.1} parent=1 // pred_fallthru
      _
    %p15 = scmp.eq.s32.totalorder 0, 0
    // Predicated region
    $region14: #{tpu_custom_call.1} parent=1 // pred_check
      %p16 = pneg %p15
    $region15: #{tpu_custom_call.1} parent=1 // pred_check_branch
      %18 = sbr.rel (%p16) target = $region17
    $region16: #{tpu_custom_call.1} parent=1 // pred_region
      %v19 = vld [vmem:[%s2] sm:$0x1]
      %v21 = vlaneseq
      %v22 = vshrl.u32 %v21, 7
      %v23 = vsub.s32 0, %v22
      %v24 = vrot.slane %v19, %v23
      %vm26 = vcmask 130048
      %27 = vst.msk [vmem:[#allocation2] sm:$0xff] %vm26, %v24
      %28 = vst.msk [vmem:[#allocation2 + $0x8] sm:$0xff] %vm26, %v24
    $region17: #{tpu_custom_call.1} parent=1 // pred_fallthru
      _
    %v29 = vld [vmem:[#allocation2] sm:$0xff]
    %v30 = vld [vmem:[#allocation2 + $0x8] sm:$0xff]
    %v31 = vld [vmem:[%s0] sm:$0xff]
    %v32 = vld [vmem:[%s0 + $0x8] sm:$0xff]
    %v33 = vld [vmem:[%s1] sm:$0xff]
    %v34 = vld [vmem:[%s1 + $0x8] sm:$0xff]
    %v35 = vld [vmem:[%s1 + $0x10] sm:$0xff]
    %v36 = vld [vmem:[%s1 + $0x18] sm:$0xff]
    %vm37 = vcmask 261120
    %v39 = vsel %vm37, %v31, 0
    %v42 = vsel %vm37, %v32, 0
    %44 = vmatprep.subr.mxu0 0.0
    %45 = vmatpush1.msra.mxu0 0.0
    %46 = vmatprep.subr.mxu0 0.0
    %47 = vmatpush1.msra.mxu0 0.0
    %48 = vmatprep.subr.mxu0 0.0
    %49 = vmatpush1.msra.mxu0 0.0
    %50 = vmatprep.subr.mxu0 0.0
    %51 = vmatpush1.msra.mxu0 0.0
    %52 = vmatprep.subr.mxu0 0.0
    %53 = vmatpush1.msra.mxu0 0.0
    %54 = vmatprep.subr.mxu0 0.0
    %55 = vmatpush1.msra.mxu0 0.0
    %56 = vmatprep.subr.mxu0 0.0
    %57 = vmatpush1.msra.mxu0 0.0
    %58 = vmatprep.subr.mxu0 0.0
    %59 = vmatpush1.msra.mxu0 0.0
    %60 = vmatprep.subr.mxu0 0.0
    %61 = vmatpush1.msra.mxu0 0.0
    %62 = vmatprep.subr.mxu0 0.0
    %63 = vmatpush1.msra.mxu0 0.0
    %64 = vmatprep.subr.mxu0 0.0
    %65 = vmatpush1.msra.mxu0 0.0
    %66 = vmatprep.subr.mxu0 0.0
    %67 = vmatpush1.msra.mxu0 0.0
    %68 = vmatprep.subr.mxu0 0.0
    %69 = vmatpush1.msra.mxu0 %v36
    %70 = vmatprep.subr.mxu0 0.0
    %71 = vmatpush1.msra.mxu0 %v35
    %72 = vmatprep.subr.mxu0 0.0
    %73 = vmatpush1.msra.mxu0 %v34
    %74 = vmatprep.subr.mxu0 0.0
    %75 = vmatpush1.msra.mxu0 %v33
    %76 = vmatprep.subr.mxu0 0.0
    %77 = vmatpush2.msra.mxu0 0.0
    %78 = vmatprep.subr.mxu0 0.0
    %79 = vmatpush2.msra.mxu0 0.0
    %80 = vmatprep.subr.mxu0 0.0
    %81 = vmatpush2.msra.mxu0 0.0
    %82 = vmatprep.subr.mxu0 0.0
    %83 = vmatpush2.msra.mxu0 0.0
    %84 = vmatprep.subr.mxu0 0.0
    %85 = vmatpush2.msra.mxu0 0.0
    %86 = vmatprep.subr.mxu0 0.0
    %87 = vmatpush2.msra.mxu0 0.0
    %88 = vmatprep.subr.mxu0 0.0
    %89 = vmatpush2.msra.mxu0 0.0
    %90 = vmatprep.subr.mxu0 0.0
    %91 = vmatpush2.msra.mxu0 0.0
    %92 = vmatprep.subr.mxu0 0.0
    %93 = vmatpush2.msra.mxu0 0.0
    %94 = vmatprep.subr.mxu0 0.0
    %95 = vmatpush2.msra.mxu0 0.0
    %96 = vmatprep.subr.mxu0 0.0
    %97 = vmatpush2.msra.mxu0 0.0
    %98 = vmatprep.subr.mxu0 0.0
    %99 = vmatpush2.msra.mxu0 0.0
    %100 = vmatprep.subr.mxu0 0.0
    %101 = vmatpush2.msra.mxu0 0.0
    %102 = vmatprep.subr.mxu0 0.0
    %103 = vmatpush2.msra.mxu0 0.0
    %104 = vmatprep.subr.mxu0 0.0
    %105 = vmatpush2.msra.mxu0 0.0
    %106 = vmatprep.subr.mxu0 0.0
    %107 = vmatpush2.msra.mxu0 0.0
    %108 = vmatprep.mubr.f32.mxu0 0.0
    %109 = vmatmul.mubr.f32.gmra.mxu0 %v39
    %v110 = vpop.f32.mrf.mxu0
    %v111 = vadd.f32 0.0, %v110
    %v112 = vpop.f32.mrf.mxu0
    %113 = vmatprep.mubr.f32.mxu0 0.0
    %114 = vmatmul.mubr.f32.gmra.mxu0 %v42
    %v115 = vpop.f32.mrf.mxu0
    %v116 = vadd.f32 0.0, %v115
    %v117 = vpop.f32.mrf.mxu0
    %118 = vdwg.mxu0
    %v119 = vadd.f32 %v29, %v111
    %v120 = vadd.f32 %v30, %v116
    %vm121 = vcmask 130048
    %122 = vst.msk [vmem:[#allocation2] sm:$0xff] %vm121, %v119
    %123 = vst.msk [vmem:[#allocation2 + $0x8] sm:$0xff] %vm121, %v120
    // Predicated region
    $region18: #{tpu_custom_call.1} parent=1 // pred_check
      _
    $region19: #{tpu_custom_call.1} parent=1 // pred_check_branch
      %125 = sbr.rel (0) target = $region21
    $region20: #{tpu_custom_call.1} parent=1 // pred_region
      %s127 = ssub.s32 256, 256
      %128 = vsyncadd [#allocation3], %s127
      %s129 = sshll.u32 [#allocation2], 4
      %s130 = int_to_ptr.vmem [resolvable:$true] %s129
      %135 = dma.vmem_to_hbm [thread:$0]  %s130, 256, %s3, [#allocation3], 128, 128, 8
    $region21: #{tpu_custom_call.1} parent=1 // pred_fallthru
      _
    // Predicated region
    $region22: #{tpu_custom_call.1} parent=1 // pred_check
      _
    $region23: #{tpu_custom_call.1} parent=1 // pred_check_branch
      %137 = sbr.rel (0) target = $region25
    $region24: #{tpu_custom_call.1} parent=1 // pred_region
      %138 = dma.done [#allocation3], 256
    $region25: #{tpu_custom_call.1} parent=1 // pred_fallthru
      _
    %139 = vsyncpa [#allocation3], 1

</llo_original>
